<compile_context>
chip_gen: v5e
topology: v5e:2x2
jax: 0.10.0
libtpu: 0.0.40
codegen_flags: <defaults>
</compile_context>

<pallas_src>
import functools

import jax
import jax.numpy as jnp
from jax.experimental import pallas as pl
from jax.experimental.pallas import tpu as pltpu


def _criterion_kernel(meta_ref,      # VMEM (3, L) int32: label | q-idx | #targets
                      logits_ref,    # VMEM (C, L)
                      boxes_ref,     # VMEM (8, L): rows 0..3 pred, 4..7 target cxcywh
                      out_ref,       # VMEM (1, 8, 128) f32: lane0=vfl, 1=l1, 2=giou
                      *, alpha, gamma, bq_valid):
    C, L = logits_ref.shape
    chunk_id = pl.program_id(0)

    x = logits_ref[...].astype(jnp.float32)          # (C, L)
    bx = boxes_ref[...].astype(jnp.float32)          # (8, L)
    meta = meta_ref[...]                             # (3, L) int32
    labels = meta[0:1, :]                            # (1, L)
    qidx = meta[1:2, :]
    ntl = meta[2:3, :]

    # Valid-query mask (padded lanes contribute exactly zero) and the matched
    # mask.  TODO(synk): identity matching (pred j <-> target j, j < num_tgt).
    lane = jax.lax.broadcasted_iota(jnp.int32, (1, L), 1) + chunk_id * L
    valid = lane < bq_valid
    matched = (qidx < ntl) & valid
    mf = matched.astype(jnp.float32)                 # (1, L)
    vf = valid.astype(jnp.float32)                   # (1, L)

    # ---- diagonal IoU / GIoU between matched pred/target boxes -------------
    pcx, pcy, pw, ph = bx[0:1], bx[1:2], bx[2:3], bx[3:4]
    tcx, tcy, tw, th = bx[4:5], bx[5:6], bx[6:7], bx[7:8]
    px1, py1 = pcx - 0.5 * pw, pcy - 0.5 * ph
    px2, py2 = pcx + 0.5 * pw, pcy + 0.5 * ph
    tx1, ty1 = tcx - 0.5 * tw, tcy - 0.5 * th
    tx2, ty2 = tcx + 0.5 * tw, tcy + 0.5 * th

    area_p = (px2 - px1) * (py2 - py1)
    area_t = (tx2 - tx1) * (ty2 - ty1)
    inter = (jnp.maximum(jnp.minimum(px2, tx2) - jnp.maximum(px1, tx1), 0.0)
             * jnp.maximum(jnp.minimum(py2, ty2) - jnp.maximum(py1, ty1), 0.0))
    union = area_p + area_t - inter
    iou = inter / jnp.where(union > 0.0, union, 1.0)            # exact division
    earea = ((jnp.maximum(px2, tx2) - jnp.minimum(px1, tx1))
             * (jnp.maximum(py2, ty2) - jnp.minimum(py1, ty1)))
    giou = iou - (earea - union) / jnp.where(earea > 0.0, earea, 1.0)

    # ---- varifocal loss (loss_labels_vfl): 2 EUP ops per element -------------
    ax = jnp.abs(x)
    s_plus = 0.5 * (1.0 + jnp.tanh(0.5 * ax))        # sigmoid(|x|)   (EUP tanh)
    sig = jnp.where(x >= 0.0, s_plus, 1.0 - s_plus)  # sigmoid(x), torch .detach()
    if float(gamma) == 2.0:
        psg = sig * sig
    else:
        psg = jnp.exp(gamma * jnp.log(jnp.maximum(sig, 1e-30)))
    c_iota = jax.lax.broadcasted_iota(jnp.int32, (C, L), 0)
    is_tgt = matched & (c_iota == labels)            # one-hot (no f32 temp)
    target_score = jnp.where(is_tgt, iou, 0.0)       # ious.detach() at matched cls
    weight = jnp.where(is_tgt, target_score, alpha * psg)
    bce = jnp.maximum(x, 0.0) - x * target_score - jnp.log(s_plus)   # (EUP log)
    vfl = jnp.sum(weight * bce * vf)

    # ---- box losses (loss_boxes): L1 + GIoU over matched pairs ---------------
    l1 = jnp.sum(jnp.abs(bx[0:4, :] - bx[4:8, :]) * mf)
    gl = jnp.sum((1.0 - giou) * mf)

    # Pack the 3 per-chunk partial sums into a lane-dense (8, 128) output tile.
    out_lane = jax.lax.broadcasted_iota(jnp.int32, (8, 128), 1)
    tile = (jnp.where(out_lane == 0, vfl, 0.0)
            + jnp.where(out_lane == 1, l1, 0.0)
            + jnp.where(out_lane == 2, gl, 0.0))
    out_ref[0] = tile


def _criterion_forward(pred_logits, pred_boxes, labels, tgt_boxes, num_tgt, *,
                       num_classes, alpha, gamma, weight_dict):
    B, Q, C = pred_logits.shape
    assert C == num_classes
    BQ = B * Q

    # One lane chunk for small problems, two otherwise (uses both v7x
    # TensorCores via a "parallel" grid axis; no-op on v5e/v6e single-TC).
    n_chunks = 2 if BQ >= 256 else 1
    chunk = pl.cdiv(BQ, n_chunks * 128) * 128        # lanes/chunk, multiple of 128
    bqp = chunk * n_chunks
    pad = bqp - BQ

    # Layout plumbing only (no hoisted compute): classes / the 8 box coords go
    # to sublanes, the flattened batch*query axis goes to lanes (lane-dense).
    logits_cl = jnp.transpose(pred_logits, (2, 0, 1)).reshape(C, BQ)
    boxes8 = jnp.transpose(jnp.concatenate([pred_boxes, tgt_boxes], axis=-1),
                           (2, 0, 1)).reshape(8, BQ)
    qidx = jnp.broadcast_to(jnp.arange(Q, dtype=jnp.int32)[None, :],
                            (B, Q)).reshape(BQ)
    ntl = jnp.broadcast_to(num_tgt.astype(jnp.int32)[:, None],
                           (B, Q)).reshape(BQ)
    meta = jnp.stack([labels.astype(jnp.int32).reshape(BQ), qidx, ntl], axis=0)

    logits_cl = jnp.pad(logits_cl, ((0, 0), (0, pad)))
    boxes8 = jnp.pad(boxes8, ((0, 0), (0, pad)))
    meta = jnp.pad(meta, ((0, 0), (0, pad)))          # pad -> ntl=0 -> unmatched

    out = pl.pallas_call(
        functools.partial(_criterion_kernel, alpha=float(alpha),
                          gamma=float(gamma), bq_valid=BQ),
        out_shape=jax.ShapeDtypeStruct((n_chunks, 8, 128), jnp.float32),
        grid=(n_chunks,),
        in_specs=[
            pl.BlockSpec((3, chunk), lambda i: (0, i)),
            pl.BlockSpec((C, chunk), lambda i: (0, i)),
            pl.BlockSpec((8, chunk), lambda i: (0, i)),
        ],
        out_specs=pl.BlockSpec((1, 8, 128), lambda i: (i, 0, 0)),
        compiler_params=pltpu.CompilerParams(
            dimension_semantics=("parallel",)),
    )(meta, logits_cl, boxes8)

    # num_boxes from the per-image target counts; exact /num_boxes done once.
    # TODO(synk): no cross-replica all_reduce of num_boxes (world size 1).
    num_boxes = jnp.maximum(jnp.sum(num_tgt.astype(jnp.float32)), 1.0)
    partial = jnp.sum(out[:, 0, :], axis=0)           # (128,), lanes 0..2 used
    raw = {'loss_vfl': partial[0] / num_boxes,
           'loss_bbox': partial[1] / num_boxes,
           'loss_giou': partial[2] / num_boxes}
    return {k: raw[k] * weight_dict[k] for k in raw if k in weight_dict}


class SetCriterionPallas:
    """JAX/Pallas port of SetCriterion with losses = ('vfl', 'boxes')."""

    def __init__(self, weight_dict, losses=('vfl', 'boxes'), alpha=0.2,
                 gamma=2.0, eos_coef=1e-4, num_classes=16):
        self.num_classes = num_classes
        self.weight_dict = dict(weight_dict)
        self.losses = losses
        self.alpha = alpha
        self.gamma = gamma
        # Parity with the PyTorch registered buffer (only used by the plain CE
        # 'labels' loss path, which is not part of the ('vfl','boxes') config).
        self.empty_weight = jnp.ones((num_classes + 1,),
                                     jnp.float32).at[-1].set(eos_coef)
        self._forward = jax.jit(functools.partial(
            _criterion_forward, num_classes=num_classes, alpha=float(alpha),
            gamma=float(gamma), weight_dict=self.weight_dict))

    def __call__(self, outputs, targets):
        return self._forward(outputs['pred_logits'], outputs['pred_boxes'],
                             targets['labels'], targets['boxes'],
                             targets['num'])


if __name__ == "__main__":
    key = jax.random.PRNGKey(0)
    B, Q, C = 2, 32, 16          # batch, queries, num_classes (small shapes)
    k1, k2, k3, k4, k5, k6 = jax.random.split(key, 6)

    # model outputs
    pred_logits = jax.random.normal(k1, (B, Q, C), jnp.float32)
    p_cxcy = jax.random.uniform(k2, (B, Q, 2), minval=0.25, maxval=0.75)
    p_wh = jax.random.uniform(k3, (B, Q, 2), minval=0.05, maxval=0.30)
    pred_boxes = jnp.concatenate([p_cxcy, p_wh], axis=-1)
    outputs = {'pred_logits': pred_logits, 'pred_boxes': pred_boxes}

    # ragged targets, padded to Q (num valid targets per image in targets['num'])
    t_labels = jax.random.randint(k4, (B, Q), 0, C, dtype=jnp.int32)
    t_cxcy = jax.random.uniform(k5, (B, Q, 2), minval=0.25, maxval=0.75)
    t_wh = jax.random.uniform(k6, (B, Q, 2), minval=0.05, maxval=0.30)
    t_boxes = jnp.concatenate([t_cxcy, t_wh], axis=-1)
    targets = {'labels': t_labels, 'boxes': t_boxes,
               'num': jnp.array([3, 5], jnp.int32)}

    weight_dict = {'loss_vfl': 1.0, 'loss_bbox': 5.0, 'loss_giou': 2.0}
    criterion = SetCriterionPallas(weight_dict, num_classes=C,
                                   alpha=0.2, gamma=2.0, eos_coef=1e-4)

    losses = criterion(outputs, targets)
    losses = jax.block_until_ready(losses)

    ok = all(bool(jnp.isfinite(v)) for v in losses.values())
    if ok:
        print("KERNEL_OK")
    else:
        print("KERNEL_FAILED", {k: float(v) for k, v in losses.items()})
</pallas_src>

<mosaic_0001>
module attributes {stable_mosaic.version = 11 : i64} {
  func.func @_criterion_kernel(%arg0: i32, %arg1: memref<3x128xi32, #tpu.memory_space<vmem>>, %arg2: memref<16x128xf32, #tpu.memory_space<vmem>>, %arg3: memref<8x128xf32, #tpu.memory_space<vmem>>, %arg4: memref<1x8x128xf32, #tpu.memory_space<vmem>>) attributes {dimension_semantics = [#tpu.dimension_semantics<parallel>], iteration_bounds = array<i64: 1>, scalar_prefetch = 0 : i64, scratch_operands = 0 : i64, tpu.core_type = #tpu.core_type<tc>, window_params = [{transform_indices = @transform_0, window_bounds = array<i64: 3, 128>}, {transform_indices = @transform_1, window_bounds = array<i64: 16, 128>}, {transform_indices = @transform_2, window_bounds = array<i64: 8, 128>}, {transform_indices = @transform_3, window_bounds = array<i64: 1, 8, 128>}]} {
    %c0 = arith.constant 0 : index
    %c0_0 = arith.constant 0 : index
    %0 = vector.load %arg2[%c0, %c0_0] : memref<16x128xf32, #tpu.memory_space<vmem>>, vector<16x128xf32>
    %c0_1 = arith.constant 0 : index
    %c0_2 = arith.constant 0 : index
    %1 = vector.load %arg3[%c0_1, %c0_2] : memref<8x128xf32, #tpu.memory_space<vmem>>, vector<8x128xf32>
    %c0_3 = arith.constant 0 : index
    %c0_4 = arith.constant 0 : index
    %2 = vector.load %arg1[%c0_3, %c0_4] : memref<3x128xi32, #tpu.memory_space<vmem>>, vector<3x128xi32>
    %3 = vector.extract_strided_slice %2 {offsets = [0, 0], sizes = [1, 128], strides = [1, 1]} : vector<3x128xi32> to vector<1x128xi32>
    %4 = vector.extract_strided_slice %2 {offsets = [1, 0], sizes = [1, 128], strides = [1, 1]} : vector<3x128xi32> to vector<1x128xi32>
    %5 = vector.extract_strided_slice %2 {offsets = [2, 0], sizes = [1, 128], strides = [1, 1]} : vector<3x128xi32> to vector<1x128xi32>
    %6 = tpu.iota {dimensions = array<i32: 1>} : vector<1x128xi32>
    %c128_i32 = arith.constant 128 : i32
    %7 = arith.muli %arg0, %c128_i32 : i32
    %8 = vector.broadcast %7 : i32 to vector<1x128xi32>
    %9 = arith.addi %6, %8 : vector<1x128xi32>
    %c64_i32 = arith.constant 64 : i32
    %10 = vector.broadcast %c64_i32 : i32 to vector<1x128xi32>
    %11 = arith.cmpi slt, %9, %10 : vector<1x128xi32>
    %12 = arith.cmpi slt, %4, %5 : vector<1x128xi32>
    %13 = arith.andi %12, %11 : vector<1x128xi1>
    %14 = arith.extui %13 : vector<1x128xi1> to vector<1x128xi32>
    %15 = arith.sitofp %14 : vector<1x128xi32> to vector<1x128xf32>
    %16 = arith.extui %11 : vector<1x128xi1> to vector<1x128xi32>
    %17 = arith.sitofp %16 : vector<1x128xi32> to vector<1x128xf32>
    %18 = vector.extract_strided_slice %1 {offsets = [0, 0], sizes = [1, 128], strides = [1, 1]} : vector<8x128xf32> to vector<1x128xf32>
    %19 = vector.extract_strided_slice %1 {offsets = [1, 0], sizes = [1, 128], strides = [1, 1]} : vector<8x128xf32> to vector<1x128xf32>
    %20 = vector.extract_strided_slice %1 {offsets = [2, 0], sizes = [1, 128], strides = [1, 1]} : vector<8x128xf32> to vector<1x128xf32>
    %21 = vector.extract_strided_slice %1 {offsets = [3, 0], sizes = [1, 128], strides = [1, 1]} : vector<8x128xf32> to vector<1x128xf32>
    %22 = vector.extract_strided_slice %1 {offsets = [4, 0], sizes = [1, 128], strides = [1, 1]} : vector<8x128xf32> to vector<1x128xf32>
    %23 = vector.extract_strided_slice %1 {offsets = [5, 0], sizes = [1, 128], strides = [1, 1]} : vector<8x128xf32> to vector<1x128xf32>
    %24 = vector.extract_strided_slice %1 {offsets = [6, 0], sizes = [1, 128], strides = [1, 1]} : vector<8x128xf32> to vector<1x128xf32>
    %25 = vector.extract_strided_slice %1 {offsets = [7, 0], sizes = [1, 128], strides = [1, 1]} : vector<8x128xf32> to vector<1x128xf32>
    %cst = arith.constant 5.000000e-01 : f32
    %26 = vector.broadcast %cst : f32 to vector<1x128xf32>
    %27 = arith.mulf %26, %20 : vector<1x128xf32>
    %28 = arith.subf %18, %27 : vector<1x128xf32>
    %cst_5 = arith.constant 5.000000e-01 : f32
    %29 = vector.broadcast %cst_5 : f32 to vector<1x128xf32>
    %30 = arith.mulf %29, %21 : vector<1x128xf32>
    %31 = arith.subf %19, %30 : vector<1x128xf32>
    %cst_6 = arith.constant 5.000000e-01 : f32
    %32 = vector.broadcast %cst_6 : f32 to vector<1x128xf32>
    %33 = arith.mulf %32, %20 : vector<1x128xf32>
    %34 = arith.addf %18, %33 : vector<1x128xf32>
    %cst_7 = arith.constant 5.000000e-01 : f32
    %35 = vector.broadcast %cst_7 : f32 to vector<1x128xf32>
    %36 = arith.mulf %35, %21 : vector<1x128xf32>
    %37 = arith.addf %19, %36 : vector<1x128xf32>
    %cst_8 = arith.constant 5.000000e-01 : f32
    %38 = vector.broadcast %cst_8 : f32 to vector<1x128xf32>
    %39 = arith.mulf %38, %24 : vector<1x128xf32>
    %40 = arith.subf %22, %39 : vector<1x128xf32>
    %cst_9 = arith.constant 5.000000e-01 : f32
    %41 = vector.broadcast %cst_9 : f32 to vector<1x128xf32>
    %42 = arith.mulf %41, %25 : vector<1x128xf32>
    %43 = arith.subf %23, %42 : vector<1x128xf32>
    %cst_10 = arith.constant 5.000000e-01 : f32
    %44 = vector.broadcast %cst_10 : f32 to vector<1x128xf32>
    %45 = arith.mulf %44, %24 : vector<1x128xf32>
    %46 = arith.addf %22, %45 : vector<1x128xf32>
    %cst_11 = arith.constant 5.000000e-01 : f32
    %47 = vector.broadcast %cst_11 : f32 to vector<1x128xf32>
    %48 = arith.mulf %47, %25 : vector<1x128xf32>
    %49 = arith.addf %23, %48 : vector<1x128xf32>
    %50 = arith.subf %34, %28 : vector<1x128xf32>
    %51 = arith.subf %37, %31 : vector<1x128xf32>
    %52 = arith.mulf %50, %51 : vector<1x128xf32>
    %53 = arith.subf %46, %40 : vector<1x128xf32>
    %54 = arith.subf %49, %43 : vector<1x128xf32>
    %55 = arith.mulf %53, %54 : vector<1x128xf32>
    %56 = arith.minimumf %34, %46 : vector<1x128xf32>
    %57 = arith.maximumf %28, %40 : vector<1x128xf32>
    %58 = arith.subf %56, %57 : vector<1x128xf32>
    %cst_12 = arith.constant 0.000000e+00 : f32
    %59 = vector.broadcast %cst_12 : f32 to vector<1x128xf32>
    %60 = arith.maximumf %58, %59 : vector<1x128xf32>
    %61 = arith.minimumf %37, %49 : vector<1x128xf32>
    %62 = arith.maximumf %31, %43 : vector<1x128xf32>
    %63 = arith.subf %61, %62 : vector<1x128xf32>
    %cst_13 = arith.constant 0.000000e+00 : f32
    %64 = vector.broadcast %cst_13 : f32 to vector<1x128xf32>
    %65 = arith.maximumf %63, %64 : vector<1x128xf32>
    %66 = arith.mulf %60, %65 : vector<1x128xf32>
    %67 = arith.addf %52, %55 : vector<1x128xf32>
    %68 = arith.subf %67, %66 : vector<1x128xf32>
    %cst_14 = arith.constant 0.000000e+00 : f32
    %69 = vector.broadcast %cst_14 : f32 to vector<1x128xf32>
    %70 = arith.cmpf ogt, %68, %69 : vector<1x128xf32>
    %cst_15 = arith.constant 1.000000e+00 : f32
    %71 = vector.broadcast %cst_15 : f32 to vector<1x128xf32>
    %72 = arith.select %70, %68, %71 : vector<1x128xi1>, vector<1x128xf32>
    %73 = arith.divf %66, %72 : vector<1x128xf32>
    %74 = arith.maximumf %34, %46 : vector<1x128xf32>
    %75 = arith.minimumf %28, %40 : vector<1x128xf32>
    %76 = arith.subf %74, %75 : vector<1x128xf32>
    %77 = arith.maximumf %37, %49 : vector<1x128xf32>
    %78 = arith.minimumf %31, %43 : vector<1x128xf32>
    %79 = arith.subf %77, %78 : vector<1x128xf32>
    %80 = arith.mulf %76, %79 : vector<1x128xf32>
    %81 = arith.subf %80, %68 : vector<1x128xf32>
    %cst_16 = arith.constant 0.000000e+00 : f32
    %82 = vector.broadcast %cst_16 : f32 to vector<1x128xf32>
    %83 = arith.cmpf ogt, %80, %82 : vector<1x128xf32>
    %cst_17 = arith.constant 1.000000e+00 : f32
    %84 = vector.broadcast %cst_17 : f32 to vector<1x128xf32>
    %85 = arith.select %83, %80, %84 : vector<1x128xi1>, vector<1x128xf32>
    %86 = arith.divf %81, %85 : vector<1x128xf32>
    %87 = arith.subf %73, %86 : vector<1x128xf32>
    %88 = math.absf %0 : vector<16x128xf32>
    %cst_18 = arith.constant 5.000000e-01 : f32
    %89 = vector.broadcast %cst_18 : f32 to vector<16x128xf32>
    %90 = arith.mulf %89, %88 : vector<16x128xf32>
    %91 = math.tanh %90 : vector<16x128xf32>
    %cst_19 = arith.constant 1.000000e+00 : f32
    %92 = vector.broadcast %cst_19 : f32 to vector<16x128xf32>
    %93 = arith.addf %92, %91 : vector<16x128xf32>
    %cst_20 = arith.constant 5.000000e-01 : f32
    %94 = vector.broadcast %cst_20 : f32 to vector<16x128xf32>
    %95 = arith.mulf %94, %93 : vector<16x128xf32>
    %cst_21 = arith.constant 0.000000e+00 : f32
    %96 = vector.broadcast %cst_21 : f32 to vector<16x128xf32>
    %97 = arith.cmpf oge, %0, %96 : vector<16x128xf32>
    %cst_22 = arith.constant 1.000000e+00 : f32
    %98 = vector.broadcast %cst_22 : f32 to vector<16x128xf32>
    %99 = arith.subf %98, %95 : vector<16x128xf32>
    %100 = arith.select %97, %95, %99 : vector<16x128xi1>, vector<16x128xf32>
    %101 = arith.mulf %100, %100 : vector<16x128xf32>
    %102 = tpu.iota {dimensions = array<i32: 0>} : vector<16x128xi32>
    %103 = vector.broadcast %3 : vector<1x128xi32> to vector<16x128xi32>
    %104 = arith.cmpi eq, %102, %103 : vector<16x128xi32>
    %105 = vector.broadcast %13 : vector<1x128xi1> to vector<16x128xi1>
    %106 = arith.andi %105, %104 : vector<16x128xi1>
    %cst_23 = arith.constant 0.000000e+00 : f32
    %107 = vector.shape_cast %73 : vector<1x128xf32> to vector<1x128xf32>
    %108 = vector.broadcast %107 : vector<1x128xf32> to vector<16x128xf32>
    %109 = vector.broadcast %cst_23 : f32 to vector<16x128xf32>
    %110 = arith.select %106, %108, %109 : vector<16x128xi1>, vector<16x128xf32>
    %cst_24 = arith.constant 2.000000e-01 : f32
    %111 = vector.broadcast %cst_24 : f32 to vector<16x128xf32>
    %112 = arith.mulf %111, %101 : vector<16x128xf32>
    %113 = arith.select %106, %110, %112 : vector<16x128xi1>, vector<16x128xf32>
    %cst_25 = arith.constant 0.000000e+00 : f32
    %114 = vector.broadcast %cst_25 : f32 to vector<16x128xf32>
    %115 = arith.maximumf %0, %114 : vector<16x128xf32>
    %116 = arith.mulf %0, %110 : vector<16x128xf32>
    %117 = arith.subf %115, %116 : vector<16x128xf32>
    %118 = math.log %95 : vector<16x128xf32>
    %119 = arith.subf %117, %118 : vector<16x128xf32>
    %120 = arith.mulf %113, %119 : vector<16x128xf32>
    %121 = vector.broadcast %17 : vector<1x128xf32> to vector<16x128xf32>
    %122 = arith.mulf %120, %121 : vector<16x128xf32>
    %123 = vector.shape_cast %122 : vector<16x128xf32> to vector<1x16x128xf32>
    %cst_26 = arith.constant dense<0.000000e+00> : vector<1xf32>
    %124 = vector.multi_reduction <add>, %123, %cst_26 [1, 2] : vector<1x16x128xf32> to vector<1xf32>
    %125 = vector.shape_cast %124 : vector<1xf32> to vector<1x1x1xf32>
    %126 = vector.extract %125[0, 0, 0] : f32 from vector<1x1x1xf32>
    %127 = vector.extract_strided_slice %1 {offsets = [0, 0], sizes = [4, 128], strides = [1, 1]} : vector<8x128xf32> to vector<4x128xf32>
    %128 = vector.extract_strided_slice %1 {offsets = [4, 0], sizes = [4, 128], strides = [1, 1]} : vector<8x128xf32> to vector<4x128xf32>
    %129 = arith.subf %127, %128 : vector<4x128xf32>
    %130 = math.absf %129 : vector<4x128xf32>
    %131 = vector.broadcast %15 : vector<1x128xf32> to vector<4x128xf32>
    %132 = arith.mulf %130, %131 : vector<4x128xf32>
    %133 = vector.shape_cast %132 : vector<4x128xf32> to vector<1x4x128xf32>
    %cst_27 = arith.constant dense<0.000000e+00> : vector<1xf32>
    %134 = vector.multi_reduction <add>, %133, %cst_27 [1, 2] : vector<1x4x128xf32> to vector<1xf32>
    %135 = vector.shape_cast %134 : vector<1xf32> to vector<1x1x1xf32>
    %136 = vector.extract %135[0, 0, 0] : f32 from vector<1x1x1xf32>
    %cst_28 = arith.constant 1.000000e+00 : f32
    %137 = vector.broadcast %cst_28 : f32 to vector<1x128xf32>
    %138 = arith.subf %137, %87 : vector<1x128xf32>
    %139 = arith.mulf %138, %15 : vector<1x128xf32>
    %140 = vector.shape_cast %139 : vector<1x128xf32> to vector<1x1x128xf32>
    %cst_29 = arith.constant dense<0.000000e+00> : vector<1xf32>
    %141 = vector.multi_reduction <add>, %140, %cst_29 [1, 2] : vector<1x1x128xf32> to vector<1xf32>
    %142 = vector.shape_cast %141 : vector<1xf32> to vector<1x1x1xf32>
    %143 = vector.extract %142[0, 0, 0] : f32 from vector<1x1x1xf32>
    %144 = tpu.iota {dimensions = array<i32: 1>} : vector<8x128xi32>
    %c0_i32 = arith.constant 0 : i32
    %145 = vector.broadcast %c0_i32 : i32 to vector<8x128xi32>
    %146 = arith.cmpi eq, %144, %145 : vector<8x128xi32>
    %cst_30 = arith.constant 0.000000e+00 : f32
    %147 = vector.broadcast %126 : f32 to vector<8x128xf32>
    %148 = vector.broadcast %cst_30 : f32 to vector<8x128xf32>
    %149 = arith.select %146, %147, %148 : vector<8x128xi1>, vector<8x128xf32>
    %c1_i32 = arith.constant 1 : i32
    %150 = vector.broadcast %c1_i32 : i32 to vector<8x128xi32>
    %151 = arith.cmpi eq, %144, %150 : vector<8x128xi32>
    %cst_31 = arith.constant 0.000000e+00 : f32
    %152 = vector.broadcast %136 : f32 to vector<8x128xf32>
    %153 = vector.broadcast %cst_31 : f32 to vector<8x128xf32>
    %154 = arith.select %151, %152, %153 : vector<8x128xi1>, vector<8x128xf32>
    %155 = arith.addf %149, %154 : vector<8x128xf32>
    %c2_i32 = arith.constant 2 : i32
    %156 = vector.broadcast %c2_i32 : i32 to vector<8x128xi32>
    %157 = arith.cmpi eq, %144, %156 : vector<8x128xi32>
    %cst_32 = arith.constant 0.000000e+00 : f32
    %158 = vector.broadcast %143 : f32 to vector<8x128xf32>
    %159 = vector.broadcast %cst_32 : f32 to vector<8x128xf32>
    %160 = arith.select %157, %158, %159 : vector<8x128xi1>, vector<8x128xf32>
    %161 = arith.addf %155, %160 : vector<8x128xf32>
    %c0_33 = arith.constant 0 : index
    %c0_34 = arith.constant 0 : index
    %c0_35 = arith.constant 0 : index
    %162 = vector.load %arg4[%c0_33, %c0_34, %c0_35] : memref<1x8x128xf32, #tpu.memory_space<vmem>>, vector<1x8x128xf32>
    %163 = vector.shape_cast %162 : vector<1x8x128xf32> to vector<8x128xf32>
    %164 = vector.shape_cast %161 : vector<8x128xf32> to vector<1x8x128xf32>
    tpu.vector_store %arg4[%c0_33, %c0_34, %c0_35], %164 {strides = array<i32>} : memref<1x8x128xf32, #tpu.memory_space<vmem>>, vector<1x8x128xf32>,
    return
  }
  func.func @transform_0(%arg0: i32) -> (i32, i32) {
    %c0_i32 = arith.constant 0 : i32
    %c0_i32_0 = arith.constant 0 : i32
    return %c0_i32, %arg0 : i32, i32
  }
  func.func @transform_1(%arg0: i32) -> (i32, i32) {
    %c0_i32 = arith.constant 0 : i32
    %c0_i32_0 = arith.constant 0 : i32
    return %c0_i32, %arg0 : i32, i32
  }
  func.func @transform_2(%arg0: i32) -> (i32, i32) {
    %c0_i32 = arith.constant 0 : i32
    %c0_i32_0 = arith.constant 0 : i32
    return %c0_i32, %arg0 : i32, i32
  }
  func.func @transform_3(%arg0: i32) -> (i32, i32, i32) {
    %c0_i32 = arith.constant 0 : i32
    %c0_i32_0 = arith.constant 0 : i32
    %c0_i32_1 = arith.constant 0 : i32
    return %arg0, %c0_i32, %c0_i32_0 : i32, i32, i32
  }
}

</mosaic_0001>

<llo_original>
// kernel: _criterion_forward.1
$region0: #{_criterion_forward.1}
  #allocation0 [shape = 'u32[]', space=smem, size = 0x4, offset = 0x4, fixed_abs, tag = 'smem constant byte address 0x4 - core index']
  #allocation1 [shape = 'u32[72,128]{1,0:T(1,128)}', space=vmem, size = 0x9000, scoped, tag = 'internal scratch']
  %s0 = inlined_call_operand.vmem [shape: s32[3,128], index: 0, kind: input, shape index: {}]
  %s1 = inlined_call_operand.vmem [shape: f32[16,128], index: 1, kind: input, shape index: {}]
  %s2 = inlined_call_operand.vmem [shape: f32[8,128], index: 2, kind: input, shape index: {}]
  %s3 = inlined_call_operand.vmem [shape: f32[1,8,128], index: 3, kind: output, shape index: {}]
  %s4 = sld [smem:[#allocation0]]
  $region22: #{_criterion_forward.1} parent=0
    _
  %s6 = ssub.s32 1, %s4
  %s7 = scalar_select 0, %s6, %s4
  // Predicated region
  $region2: #{_criterion_forward.1} parent=0 // pred_check
    _
  $region3: #{_criterion_forward.1} parent=0 // pred_check_branch
    %9 = sbr.rel (0) target = $region5
  $region4: #{_criterion_forward.1} parent=0 // pred_region
    _
  $region5: #{_criterion_forward.1} parent=0 // pred_fallthru
    _
  // Predicated region
  $region6: #{_criterion_forward.1} parent=0 // pred_check
    _
  $region7: #{_criterion_forward.1} parent=0 // pred_check_branch
    %11 = sbr.rel (0) target = $region9
  $region8: #{_criterion_forward.1} parent=0 // pred_region
    _
  $region9: #{_criterion_forward.1} parent=0 // pred_fallthru
    _
  // Predicated region
  $region10: #{_criterion_forward.1} parent=0 // pred_check
    _
  $region11: #{_criterion_forward.1} parent=0 // pred_check_branch
    %13 = sbr.rel (0) target = $region13
  $region12: #{_criterion_forward.1} parent=0 // pred_region
    _
  $region13: #{_criterion_forward.1} parent=0 // pred_fallthru
    _
  %v14 = vld [vmem:[%s1] sm:$0xff]
  %v15 = vld [vmem:[%s1 + $0x8] sm:$0xff]
  %v16 = vld [vmem:[%s2] sm:$0xff]
  %v17 = vld [vmem:[%s0] sm:$0x7]
  %v18 = vlaneseq
  %v19 = vand.u32 %v18, 127
  %s20 = smul.u32 0, 128
  %v21 = vstv %s20
  %v22 = vadd.s32 %v19, %v21
  %vm23 = vcmp.lt.s32.totalorder %v22, 64
  %v24 = vrot.slane %v17, 1
  %vm25 = vcmp.lt.s32.totalorder %v17, %v24
  %vm26 = vmand %vm25, %vm23
  %v27 = vsel %vm26, 1, 0
  %v28 = vcvt.s32.f32 %v27
  %v29 = vsel %vm23, 1, 0
  %v30 = vcvt.s32.f32 %v29
  %v31 = vmul.f32 %v16, 0.5
  %v33 = vrot.slane %v31, 2
  %v35 = vsub.f32 %v16, %v33
  %v36 = vadd.f32 %v16, %v33
  %v37 = vsub.f32 %v36, %v35
  %v39 = vrot.slane %v37, 1
  %v41 = vmul.f32 %v37, %v39
  %v43 = vrot.slane %v36, 4
  %v45 = vmin.f32 %v36, %v43
  %v47 = vrot.slane %v35, 4
  %v49 = vmax.f32 %v35, %v47
  %v50 = vsub.f32 %v45, %v49
  %v51 = vmax.f32 %v50, 0.0
  %v53 = vrot.slane %v51, 1
  %v55 = vmul.f32 %v51, %v53
  %v57 = vrot.slane %v41, 4
  %v59 = vadd.f32 %v41, %v57
  %v60 = vsub.f32 %v59, %v55
  %vm61 = vcmp.gt.f32.partialorder %v60, 0.0
  %v62 = vsel %vm61, %v60, 1.0
  %v63 = vrcp.pop %v62
  %v64 = vmul.f32 %v62, %v63
  %v65 = vsub.f32 1.0, %v64
  %v66 = vmul.f32 %v63, %v65
  %v67 = vadd.f32 %v63, %v66
  %vm68 = vweird.f32 %v62
  %vm69 = vweird.f32 %v63
  %vm70 = vmor %vm68, %vm69
  %v71 = vsel %vm70, %v63, %v67
  %v72 = vand.u32 2147483647, %v62
  %vm73 = vcmp.eq.f32.partialorder %v72, 8.507059e+37
  %v74 = vand.u32 %v62, 2147483648
  %v75 = vor.u32 1.1754944e-38, %v74
  %v76 = vsel %vm73, %v75, %v71
  %v77 = vmul.f32 %v55, %v76
  %v78 = vmax.f32 %v36, %v43
  %v79 = vmin.f32 %v35, %v47
  %v80 = vsub.f32 %v78, %v79
  %v82 = vrot.slane %v80, 1
  %v84 = vmul.f32 %v80, %v82
  %v85 = vsub.f32 %v84, %v60
  %vm86 = vcmp.gt.f32.partialorder %v84, 0.0
  %v87 = vsel %vm86, %v84, 1.0
  %v88 = vrcp.pop %v87
  %v89 = vmul.f32 %v87, %v88
  %v90 = vsub.f32 1.0, %v89
  %v91 = vmul.f32 %v88, %v90
  %v92 = vadd.f32 %v88, %v91
  %vm93 = vweird.f32 %v87
  %vm94 = vweird.f32 %v88
  %vm95 = vmor %vm93, %vm94
  %v96 = vsel %vm95, %v88, %v92
  %v97 = vand.u32 2147483647, %v87
  %vm98 = vcmp.eq.f32.partialorder %v97, 8.507059e+37
  %v99 = vand.u32 %v87, 2147483648
  %v100 = vor.u32 1.1754944e-38, %v99
  %v101 = vsel %vm98, %v100, %v96
  %v102 = vmul.f32 %v85, %v101
  %v103 = vsub.f32 %v77, %v102
  %v104 = vand.u32 2147483647, %v14
  %v105 = vand.u32 2147483647, %v15
  %v106 = vmul.f32 %v104, 0.5
  %v107 = vmul.f32 %v105, 0.5
  %v108 = vtanh.pop %v106
  %v109 = vtanh.pop %v107
  %v110 = vadd.f32 %v108, 1.0
  %v111 = vadd.f32 %v109, 1.0
  %v112 = vmul.f32 %v110, 0.5
  %v113 = vmul.f32 %v111, 0.5
  %vm114 = vcmp.ge.f32.partialorder %v14, 0.0
  %vm115 = vcmp.ge.f32.partialorder %v15, 0.0
  %v116 = vsub.f32 1.0, %v112
  %v117 = vsub.f32 1.0, %v113
  %v118 = vsel %vm114, %v112, %v116
  %v119 = vsel %vm115, %v113, %v117
  %v120 = vmul.f32 %v118, %v118
  %v121 = vmul.f32 %v119, %v119
  %v122 = vlaneseq
  %v123 = vshrl.u32 %v122, 7
  %v124 = vadd.s32 %v123, 8
  %v125 = vperm.slane %v17, 0
  %vm126 = vcmp.eq.s32.totalorder %v123, %v125
  %vm127 = vcmp.eq.s32.totalorder %v124, %v125
  %v128 = vperm.slane %v27, 1
  %vm129 = vcmp.eq.s32.totalorder %v128, 1
  %vm130 = vmand %vm129, %vm126
  %vm131 = vmand %vm129, %vm127
  %v132 = vperm.slane %v77, 0
  %v133 = vsel %vm130, %v132, 0.0
  %v134 = vsel %vm131, %v132, 0.0
  %v135 = vmul.f32 %v120, 0.2
  %v136 = vmul.f32 %v121, 0.2
  %v137 = vsel %vm130, %v132, %v135
  %v138 = vsel %vm131, %v132, %v136
  %v139 = vmax.f32 %v14, 0.0
  %v140 = vmax.f32 %v15, 0.0
  %v141 = vmul.f32 %v14, %v133
  %v142 = vmul.f32 %v15, %v134
  %v143 = vsub.f32 %v139, %v141
  %v144 = vsub.f32 %v140, %v142
  %v145 = vlog2.pop %v112
  %v146 = vmul.f32 %v145, 0.6931472
  %v147 = vlog2.pop %v113
  %v148 = vmul.f32 %v147, 0.6931472
  %v149 = vsub.f32 %v143, %v146
  %v150 = vsub.f32 %v144, %v148
  %v151 = vmul.f32 %v137, %v149
  %v152 = vmul.f32 %v138, %v150
  %v153 = vmul.f32 %v151, %v30
  %v154 = vmul.f32 %v152, %v30
  %v155 = vadd.f32 %v153, %v154
  %156 = vadd.xlane.f32.xlu0 %v155
  %v157 = vpop.xlane.xlu0 %156
  %v158 = vrot.slane %v157, 4
  %v159 = vadd.f32 %v157, %v158
  %v160 = vrot.slane %v159, 2
  %v161 = vadd.f32 %v159, %v160
  %v162 = vrot.slane %v161, 1
  %v163 = vadd.f32 %v161, %v162
  %s164 = vtos %v163
  %v166 = vrot.slane %v16, 4
  %v168 = vsub.f32 %v16, %v166
  %v169 = vand.u32 2147483647, %v168
  %v170 = vperm.slane %v28, 1
  %v171 = vmul.f32 %v169, %v170
  %vm172 = vcmask 1043456
  %v173 = vsel %vm172, %v171, 0.0
  %174 = vadd.xlane.f32.xlu0 %v173
  %v175 = vpop.xlane.xlu0 %174
  %v176 = vrot.slane %v175, 4
  %v177 = vadd.f32 %v175, %v176
  %v178 = vrot.slane %v177, 2
  %v179 = vadd.f32 %v177, %v178
  %v180 = vrot.slane %v179, 1
  %v181 = vadd.f32 %v179, %v180
  %s182 = vtos %v181
  %v183 = vsub.f32 1.0, %v103
  %v185 = vrot.slane %v28, 1
  %v187 = vmul.f32 %v183, %v185
  %vm188 = vcmask 1040384
  %v189 = vsel %vm188, %v187, 0.0
  %190 = vadd.xlane.f32.xlu0 %v189
  %v191 = vpop.xlane.xlu0 %190
  %v192 = vrot.slane %v191, 4
  %v193 = vadd.f32 %v191, %v192
  %v194 = vrot.slane %v193, 2
  %v195 = vadd.f32 %v193, %v194
  %v196 = vrot.slane %v195, 1
  %v197 = vadd.f32 %v195, %v196
  %s198 = vtos %v197
  %vm199 = vcmp.eq.s32.totalorder %v19, 0
  %v200 = vstv %s164
  %v201 = vsel %vm199, %v200, 0.0
  %vm202 = vcmp.eq.s32.totalorder %v19, 1
  %v203 = vstv %s182
  %v204 = vsel %vm202, %v203, 0.0
  %v205 = vadd.f32 %v201, %v204
  %vm206 = vcmp.eq.s32.totalorder %v19, 2
  %v207 = vstv %s198
  %v208 = vsel %vm206, %v207, 0.0
  %v209 = vadd.f32 %v205, %v208
  %210 = vst [vmem:[%s3] sm:$0xff] %v209
  // Predicated region
  $region14: #{_criterion_forward.1} parent=0 // pred_check
    _
  $region15: #{_criterion_forward.1} parent=0 // pred_check_branch
    %212 = sbr.rel (0) target = $region17
  $region16: #{_criterion_forward.1} parent=0 // pred_region
    _
  $region17: #{_criterion_forward.1} parent=0 // pred_fallthru
    _
  // Predicated region
  $region18: #{_criterion_forward.1} parent=0 // pred_check
    _
  $region19: #{_criterion_forward.1} parent=0 // pred_check_branch
    %214 = sbr.rel (0) target = $region21
  $region20: #{_criterion_forward.1} parent=0 // pred_region
    _
  $region21: #{_criterion_forward.1} parent=0 // pred_fallthru
    _

</llo_original>
